<compile_context>
chip_gen: v5e
topology: v5e:2x2
jax: 0.10.0
libtpu: 0.0.40
codegen_flags: <defaults>
</compile_context>

<pallas_src>
import functools

import jax
import jax.numpy as jnp
from jax.experimental import pallas as pl
from jax.experimental.pallas import tpu as pltpu


# ----------------------------------------------------------------------------
# Fused kernel: whole batch + whole sequence in one invocation.
# Gate order follows PyTorch: i, f, g, o.
# ----------------------------------------------------------------------------
def lstm_mlp_kernel(x_ref, wih_ref, whh_ref, b_ref,
                    w1_ref, b1_ref, w2_ref, b2_ref, w3_ref, b3_ref,
                    out_ref, *, batch):
    B = batch
    TB = x_ref.shape[0]
    T = TB // B
    H = whh_ref.shape[0]

    # --- Hoisted input projection: one (T*B, I) x (I, 4H) bf16 MXU call. ---
    # Time-major rows (t*B + b): each step below reads a contiguous (B, 4H) slab.
    xp = (jnp.dot(x_ref[...].astype(jnp.bfloat16), wih_ref[...],
                  preferred_element_type=jnp.float32)
          + b_ref[...])                                           # (T*B, 4H) f32

    whh = whh_ref[...]                                            # (H, 4H) bf16
    h = jnp.zeros((B, H), jnp.float32)
    c = jnp.zeros((B, H), jnp.float32)
    hs = []

    # --- Fully-unrolled serial recurrence (T static): only h @ W_hh per step. ---
    for t in range(T):
        gates = xp[t * B:(t + 1) * B, :] + jnp.dot(
            h.astype(jnp.bfloat16), whh,
            preferred_element_type=jnp.float32)                   # (B, 4H) f32
        sig = jax.nn.sigmoid(gates)          # one EUP push covers i, f and o
        i_g = sig[:, 0 * H:1 * H]
        f_g = sig[:, 1 * H:2 * H]
        o_g = sig[:, 3 * H:4 * H]
        g_g = jnp.tanh(gates[:, 2 * H:3 * H])
        c = f_g * c + i_g * g_g
        h = o_g * jnp.tanh(c)
        hs.append(h)                         # stays in registers

    tokens = jnp.concatenate(hs, axis=0)                          # (T*B, H) f32

    # --- Fused MLP head applied once to the whole token slab. ---
    h1 = jnp.maximum(
        jnp.dot(tokens.astype(jnp.bfloat16), w1_ref[...],
                preferred_element_type=jnp.float32) + b1_ref[...], 0.0)
    h2 = jnp.maximum(
        jnp.dot(h1.astype(jnp.bfloat16), w2_ref[...],
                preferred_element_type=jnp.float32) + b2_ref[...], 0.0)
    y = (jnp.dot(h2.astype(jnp.bfloat16), w3_ref[...],
                 preferred_element_type=jnp.float32) + b3_ref[...])   # (T*B, O)
    out_ref[...] = y.astype(out_ref.dtype)                        # single store


# ----------------------------------------------------------------------------
# Wrapper: single pallas_call, no batch grid (B folded into the kernel math).
# ----------------------------------------------------------------------------
@jax.jit
def lstm_model_forward(x, params):
    B, T, I = x.shape
    O = params["w3_t"].shape[1]

    # bf16 MXU operands; biases and all accumulation stay f32.
    wih = params["w_ih_t"].astype(jnp.bfloat16)
    whh = params["w_hh_t"].astype(jnp.bfloat16)
    w1 = params["w1_t"].astype(jnp.bfloat16)
    w2 = params["w2_t"].astype(jnp.bfloat16)
    w3 = params["w3_t"].astype(jnp.bfloat16)

    # Wrapper-side layout plumbing only: time-major flatten so the kernel sees
    # a contiguous (B, 4H) slab per step and needs zero in-kernel transposes.
    x_tb = jnp.swapaxes(x, 0, 1).reshape(T * B, I)

    def full_spec(a):
        nd = a.ndim
        return pl.BlockSpec(a.shape, lambda i: (0,) * nd)

    y = pl.pallas_call(
        functools.partial(lstm_mlp_kernel, batch=B),
        out_shape=jax.ShapeDtypeStruct((T * B, O), jnp.float32),
        grid=(1,),                       # single body; B folded into the math
        in_specs=[
            full_spec(x_tb),
            full_spec(wih), full_spec(whh), full_spec(params["b_lstm"]),
            full_spec(w1), full_spec(params["b1"]),
            full_spec(w2), full_spec(params["b2"]),
            full_spec(w3), full_spec(params["b3"]),
        ],
        out_specs=pl.BlockSpec((T * B, O), lambda i: (0, 0)),
        compiler_params=pltpu.CompilerParams(
            dimension_semantics=("arbitrary",)),
    )(x_tb, wih, whh, params["b_lstm"], w1, params["b1"],
      w2, params["b2"], w3, params["b3"])

    # (T*B, O) time-major -> (B, T, O) batch-first.
    return jnp.swapaxes(y.reshape(T, B, O), 0, 1)


# ----------------------------------------------------------------------------
# Parameter init matching PyTorch nn.LSTM / nn.Linear layouts (stored transposed).
# ----------------------------------------------------------------------------
def init_params(key, input_size, hidden_size, output_size):
    ks = jax.random.split(key, 10)
    s = 1.0 / jnp.sqrt(hidden_size)

    def u(k, shape, scale):
        return jax.random.uniform(k, shape, jnp.float32, -scale, scale)

    w_ih = u(ks[0], (4 * hidden_size, input_size), s)
    w_hh = u(ks[1], (4 * hidden_size, hidden_size), s)
    b_ih = u(ks[2], (4 * hidden_size,), s)
    b_hh = u(ks[3], (4 * hidden_size,), s)

    w1 = u(ks[4], (64, hidden_size), 1.0 / jnp.sqrt(hidden_size))
    b1 = u(ks[5], (64,), 1.0 / jnp.sqrt(hidden_size))
    w2 = u(ks[6], (32, 64), 1.0 / jnp.sqrt(64.0))
    b2 = u(ks[7], (32,), 1.0 / jnp.sqrt(64.0))
    w3 = u(ks[8], (output_size, 32), 1.0 / jnp.sqrt(32.0))
    b3 = u(ks[9], (output_size,), 1.0 / jnp.sqrt(32.0))

    return {
        "w_ih_t": w_ih.T,                       # (I, 4H)
        "w_hh_t": w_hh.T,                       # (H, 4H)
        "b_lstm": (b_ih + b_hh)[None, :],       # (1, 4H)
        "w1_t": w1.T, "b1": b1[None, :],
        "w2_t": w2.T, "b2": b2[None, :],
        "w3_t": w3.T, "b3": b3[None, :],
    }


# Pure-JAX f32 reference (same math as the PyTorch module) for a sanity check.
def reference_forward(x, params):
    B, T, I = x.shape
    H = params["w_hh_t"].shape[0]

    def step(carry, x_t):
        h, c = carry
        gates = x_t @ params["w_ih_t"] + h @ params["w_hh_t"] + params["b_lstm"]
        i_g = jax.nn.sigmoid(gates[:, 0 * H:1 * H])
        f_g = jax.nn.sigmoid(gates[:, 1 * H:2 * H])
        g_g = jnp.tanh(gates[:, 2 * H:3 * H])
        o_g = jax.nn.sigmoid(gates[:, 3 * H:4 * H])
        c = f_g * c + i_g * g_g
        h = o_g * jnp.tanh(c)
        return (h, c), h

    h0 = jnp.zeros((B, H), jnp.float32)
    (_, _), hs = jax.lax.scan(step, (h0, h0), jnp.transpose(x, (1, 0, 2)))
    h = jnp.transpose(hs, (1, 0, 2)).reshape(B * T, H)
    h = jnp.maximum(h @ params["w1_t"] + params["b1"], 0.0)
    h = jnp.maximum(h @ params["w2_t"] + params["b2"], 0.0)
    out = h @ params["w3_t"] + params["b3"]
    return out.reshape(B, T, -1)


if __name__ == "__main__":
    B, T = 2, 8
    input_size, hidden_size, output_size = 16, 32, 8

    key = jax.random.PRNGKey(0)
    k_x, k_p = jax.random.split(key)
    x = jax.random.normal(k_x, (B, T, input_size), jnp.float32)
    params = init_params(k_p, input_size, hidden_size, output_size)

    out = lstm_model_forward(x, params)
    out = jax.block_until_ready(out)

    assert out.shape == (B, T, output_size), out.shape
    ref = reference_forward(x, params)
    # bf16 MXU operands (f32 accumulation) vs pure-f32 reference -> small drift.
    assert jnp.allclose(out, ref, atol=3e-2, rtol=3e-2), float(
        jnp.max(jnp.abs(out - ref)))

    print("KERNEL_OK")
</pallas_src>

<mosaic_0001>
module attributes {stable_mosaic.version = 11 : i64} {
  func.func @lstm_mlp_kernel(%arg0: i32, %arg1: memref<16x16xf32, #tpu.memory_space<vmem>>, %arg2: memref<16x128xbf16, #tpu.memory_space<vmem>>, %arg3: memref<32x128xbf16, #tpu.memory_space<vmem>>, %arg4: memref<1x128xf32, #tpu.memory_space<vmem>>, %arg5: memref<32x64xbf16, #tpu.memory_space<vmem>>, %arg6: memref<1x64xf32, #tpu.memory_space<vmem>>, %arg7: memref<64x32xbf16, #tpu.memory_space<vmem>>, %arg8: memref<1x32xf32, #tpu.memory_space<vmem>>, %arg9: memref<32x8xbf16, #tpu.memory_space<vmem>>, %arg10: memref<1x8xf32, #tpu.memory_space<vmem>>, %arg11: memref<16x8xf32, #tpu.memory_space<vmem>>) attributes {dimension_semantics = [#tpu.dimension_semantics<arbitrary>], iteration_bounds = array<i64: 1>, scalar_prefetch = 0 : i64, scratch_operands = 0 : i64, tpu.core_type = #tpu.core_type<tc>, window_params = [{pipeline_mode = #tpu.pipeline_mode<synchronous>, transform_indices = @transform_0, window_bounds = array<i64: 16, 16>}, {pipeline_mode = #tpu.pipeline_mode<synchronous>, transform_indices = @transform_1, window_bounds = array<i64: 16, 128>}, {pipeline_mode = #tpu.pipeline_mode<synchronous>, transform_indices = @transform_2, window_bounds = array<i64: 32, 128>}, {pipeline_mode = #tpu.pipeline_mode<synchronous>, transform_indices = @transform_3, window_bounds = array<i64: 1, 128>}, {pipeline_mode = #tpu.pipeline_mode<synchronous>, transform_indices = @transform_4, window_bounds = array<i64: 32, 64>}, {pipeline_mode = #tpu.pipeline_mode<synchronous>, transform_indices = @transform_5, window_bounds = array<i64: 1, 64>}, {pipeline_mode = #tpu.pipeline_mode<synchronous>, transform_indices = @transform_6, window_bounds = array<i64: 64, 32>}, {pipeline_mode = #tpu.pipeline_mode<synchronous>, transform_indices = @transform_7, window_bounds = array<i64: 1, 32>}, {pipeline_mode = #tpu.pipeline_mode<synchronous>, transform_indices = @transform_8, window_bounds = array<i64: 32, 8>}, {pipeline_mode = #tpu.pipeline_mode<synchronous>, transform_indices = @transform_9, window_bounds = array<i64: 1, 8>}, {pipeline_mode = #tpu.pipeline_mode<synchronous>, transform_indices = @transform_10, window_bounds = array<i64: 16, 8>}]} {
    %c0 = arith.constant 0 : index
    %c0_0 = arith.constant 0 : index
    %0 = vector.load %arg1[%c0, %c0_0] : memref<16x16xf32, #tpu.memory_space<vmem>>, vector<16x16xf32>
    %1 = arith.truncf %0 : vector<16x16xf32> to vector<16x16xbf16>
    %c0_1 = arith.constant 0 : index
    %c0_2 = arith.constant 0 : index
    %2 = vector.load %arg2[%c0_1, %c0_2] : memref<16x128xbf16, #tpu.memory_space<vmem>>, vector<16x128xbf16>
    %cst = arith.constant dense<0.000000e+00> : vector<16x128xf32>
    %3 = tpu.matmul %1, %2, %cst {dimension_numbers = #tpu.dot_dimension_numbers<[1], [0], [0], [1], [0, 0, 1, 1], [], []>} : vector<16x16xbf16>, vector<16x128xbf16>, vector<16x128xf32> -> vector<16x128xf32>
    %c0_3 = arith.constant 0 : index
    %c0_4 = arith.constant 0 : index
    %4 = vector.load %arg4[%c0_3, %c0_4] : memref<1x128xf32, #tpu.memory_space<vmem>>, vector<1x128xf32>
    %5 = vector.broadcast %4 : vector<1x128xf32> to vector<16x128xf32>
    %6 = arith.addf %3, %5 : vector<16x128xf32>
    %c0_5 = arith.constant 0 : index
    %c0_6 = arith.constant 0 : index
    %7 = vector.load %arg3[%c0_5, %c0_6] : memref<32x128xbf16, #tpu.memory_space<vmem>>, vector<32x128xbf16>
    %cst_7 = arith.constant 0.000000e+00 : f32
    %8 = vector.broadcast %cst_7 : f32 to vector<2x32xf32>
    %cst_8 = arith.constant 0.000000e+00 : f32
    %9 = vector.broadcast %cst_8 : f32 to vector<2x32xf32>
    %10 = vector.extract_strided_slice %6 {offsets = [0, 0], sizes = [2, 128], strides = [1, 1]} : vector<16x128xf32> to vector<2x128xf32>
    %11 = arith.truncf %8 : vector<2x32xf32> to vector<2x32xbf16>
    %cst_9 = arith.constant dense<0.000000e+00> : vector<2x128xf32>
    %12 = tpu.matmul %11, %7, %cst_9 {dimension_numbers = #tpu.dot_dimension_numbers<[1], [0], [0], [1], [0, 0, 1, 1], [], []>} : vector<2x32xbf16>, vector<32x128xbf16>, vector<2x128xf32> -> vector<2x128xf32>
    %13 = arith.addf %10, %12 : vector<2x128xf32>
    %14 = arith.negf %13 : vector<2x128xf32>
    %15 = math.exp %14 : vector<2x128xf32>
    %cst_10 = arith.constant 1.000000e+00 : f32
    %16 = vector.broadcast %cst_10 : f32 to vector<2x128xf32>
    %17 = arith.addf %16, %15 : vector<2x128xf32>
    %18 = arith.divf %16, %17 : vector<2x128xf32>
    %19 = vector.extract_strided_slice %18 {offsets = [0, 0], sizes = [2, 32], strides = [1, 1]} : vector<2x128xf32> to vector<2x32xf32>
    %20 = vector.extract_strided_slice %18 {offsets = [0, 32], sizes = [2, 32], strides = [1, 1]} : vector<2x128xf32> to vector<2x32xf32>
    %21 = vector.extract_strided_slice %18 {offsets = [0, 96], sizes = [2, 32], strides = [1, 1]} : vector<2x128xf32> to vector<2x32xf32>
    %22 = vector.extract_strided_slice %13 {offsets = [0, 64], sizes = [2, 32], strides = [1, 1]} : vector<2x128xf32> to vector<2x32xf32>
    %23 = math.tanh %22 : vector<2x32xf32>
    %24 = arith.mulf %20, %9 : vector<2x32xf32>
    %25 = arith.mulf %19, %23 : vector<2x32xf32>
    %26 = arith.addf %24, %25 : vector<2x32xf32>
    %27 = math.tanh %26 : vector<2x32xf32>
    %28 = arith.mulf %21, %27 : vector<2x32xf32>
    %29 = vector.extract_strided_slice %6 {offsets = [2, 0], sizes = [2, 128], strides = [1, 1]} : vector<16x128xf32> to vector<2x128xf32>
    %30 = arith.truncf %28 : vector<2x32xf32> to vector<2x32xbf16>
    %cst_11 = arith.constant dense<0.000000e+00> : vector<2x128xf32>
    %31 = tpu.matmul %30, %7, %cst_11 {dimension_numbers = #tpu.dot_dimension_numbers<[1], [0], [0], [1], [0, 0, 1, 1], [], []>} : vector<2x32xbf16>, vector<32x128xbf16>, vector<2x128xf32> -> vector<2x128xf32>
    %32 = arith.addf %29, %31 : vector<2x128xf32>
    %33 = arith.negf %32 : vector<2x128xf32>
    %34 = math.exp %33 : vector<2x128xf32>
    %cst_12 = arith.constant 1.000000e+00 : f32
    %35 = vector.broadcast %cst_12 : f32 to vector<2x128xf32>
    %36 = arith.addf %35, %34 : vector<2x128xf32>
    %37 = arith.divf %35, %36 : vector<2x128xf32>
    %38 = vector.extract_strided_slice %37 {offsets = [0, 0], sizes = [2, 32], strides = [1, 1]} : vector<2x128xf32> to vector<2x32xf32>
    %39 = vector.extract_strided_slice %37 {offsets = [0, 32], sizes = [2, 32], strides = [1, 1]} : vector<2x128xf32> to vector<2x32xf32>
    %40 = vector.extract_strided_slice %37 {offsets = [0, 96], sizes = [2, 32], strides = [1, 1]} : vector<2x128xf32> to vector<2x32xf32>
    %41 = vector.extract_strided_slice %32 {offsets = [0, 64], sizes = [2, 32], strides = [1, 1]} : vector<2x128xf32> to vector<2x32xf32>
    %42 = math.tanh %41 : vector<2x32xf32>
    %43 = arith.mulf %39, %26 : vector<2x32xf32>
    %44 = arith.mulf %38, %42 : vector<2x32xf32>
    %45 = arith.addf %43, %44 : vector<2x32xf32>
    %46 = math.tanh %45 : vector<2x32xf32>
    %47 = arith.mulf %40, %46 : vector<2x32xf32>
    %48 = vector.extract_strided_slice %6 {offsets = [4, 0], sizes = [2, 128], strides = [1, 1]} : vector<16x128xf32> to vector<2x128xf32>
    %49 = arith.truncf %47 : vector<2x32xf32> to vector<2x32xbf16>
    %cst_13 = arith.constant dense<0.000000e+00> : vector<2x128xf32>
    %50 = tpu.matmul %49, %7, %cst_13 {dimension_numbers = #tpu.dot_dimension_numbers<[1], [0], [0], [1], [0, 0, 1, 1], [], []>} : vector<2x32xbf16>, vector<32x128xbf16>, vector<2x128xf32> -> vector<2x128xf32>
    %51 = arith.addf %48, %50 : vector<2x128xf32>
    %52 = arith.negf %51 : vector<2x128xf32>
    %53 = math.exp %52 : vector<2x128xf32>
    %cst_14 = arith.constant 1.000000e+00 : f32
    %54 = vector.broadcast %cst_14 : f32 to vector<2x128xf32>
    %55 = arith.addf %54, %53 : vector<2x128xf32>
    %56 = arith.divf %54, %55 : vector<2x128xf32>
    %57 = vector.extract_strided_slice %56 {offsets = [0, 0], sizes = [2, 32], strides = [1, 1]} : vector<2x128xf32> to vector<2x32xf32>
    %58 = vector.extract_strided_slice %56 {offsets = [0, 32], sizes = [2, 32], strides = [1, 1]} : vector<2x128xf32> to vector<2x32xf32>
    %59 = vector.extract_strided_slice %56 {offsets = [0, 96], sizes = [2, 32], strides = [1, 1]} : vector<2x128xf32> to vector<2x32xf32>
    %60 = vector.extract_strided_slice %51 {offsets = [0, 64], sizes = [2, 32], strides = [1, 1]} : vector<2x128xf32> to vector<2x32xf32>
    %61 = math.tanh %60 : vector<2x32xf32>
    %62 = arith.mulf %58, %45 : vector<2x32xf32>
    %63 = arith.mulf %57, %61 : vector<2x32xf32>
    %64 = arith.addf %62, %63 : vector<2x32xf32>
    %65 = math.tanh %64 : vector<2x32xf32>
    %66 = arith.mulf %59, %65 : vector<2x32xf32>
    %67 = vector.extract_strided_slice %6 {offsets = [6, 0], sizes = [2, 128], strides = [1, 1]} : vector<16x128xf32> to vector<2x128xf32>
    %68 = arith.truncf %66 : vector<2x32xf32> to vector<2x32xbf16>
    %cst_15 = arith.constant dense<0.000000e+00> : vector<2x128xf32>
    %69 = tpu.matmul %68, %7, %cst_15 {dimension_numbers = #tpu.dot_dimension_numbers<[1], [0], [0], [1], [0, 0, 1, 1], [], []>} : vector<2x32xbf16>, vector<32x128xbf16>, vector<2x128xf32> -> vector<2x128xf32>
    %70 = arith.addf %67, %69 : vector<2x128xf32>
    %71 = arith.negf %70 : vector<2x128xf32>
    %72 = math.exp %71 : vector<2x128xf32>
    %cst_16 = arith.constant 1.000000e+00 : f32
    %73 = vector.broadcast %cst_16 : f32 to vector<2x128xf32>
    %74 = arith.addf %73, %72 : vector<2x128xf32>
    %75 = arith.divf %73, %74 : vector<2x128xf32>
    %76 = vector.extract_strided_slice %75 {offsets = [0, 0], sizes = [2, 32], strides = [1, 1]} : vector<2x128xf32> to vector<2x32xf32>
    %77 = vector.extract_strided_slice %75 {offsets = [0, 32], sizes = [2, 32], strides = [1, 1]} : vector<2x128xf32> to vector<2x32xf32>
    %78 = vector.extract_strided_slice %75 {offsets = [0, 96], sizes = [2, 32], strides = [1, 1]} : vector<2x128xf32> to vector<2x32xf32>
    %79 = vector.extract_strided_slice %70 {offsets = [0, 64], sizes = [2, 32], strides = [1, 1]} : vector<2x128xf32> to vector<2x32xf32>
    %80 = math.tanh %79 : vector<2x32xf32>
    %81 = arith.mulf %77, %64 : vector<2x32xf32>
    %82 = arith.mulf %76, %80 : vector<2x32xf32>
    %83 = arith.addf %81, %82 : vector<2x32xf32>
    %84 = math.tanh %83 : vector<2x32xf32>
    %85 = arith.mulf %78, %84 : vector<2x32xf32>
    %86 = vector.extract_strided_slice %6 {offsets = [8, 0], sizes = [2, 128], strides = [1, 1]} : vector<16x128xf32> to vector<2x128xf32>
    %87 = arith.truncf %85 : vector<2x32xf32> to vector<2x32xbf16>
    %cst_17 = arith.constant dense<0.000000e+00> : vector<2x128xf32>
    %88 = tpu.matmul %87, %7, %cst_17 {dimension_numbers = #tpu.dot_dimension_numbers<[1], [0], [0], [1], [0, 0, 1, 1], [], []>} : vector<2x32xbf16>, vector<32x128xbf16>, vector<2x128xf32> -> vector<2x128xf32>
    %89 = arith.addf %86, %88 : vector<2x128xf32>
    %90 = arith.negf %89 : vector<2x128xf32>
    %91 = math.exp %90 : vector<2x128xf32>
    %cst_18 = arith.constant 1.000000e+00 : f32
    %92 = vector.broadcast %cst_18 : f32 to vector<2x128xf32>
    %93 = arith.addf %92, %91 : vector<2x128xf32>
    %94 = arith.divf %92, %93 : vector<2x128xf32>
    %95 = vector.extract_strided_slice %94 {offsets = [0, 0], sizes = [2, 32], strides = [1, 1]} : vector<2x128xf32> to vector<2x32xf32>
    %96 = vector.extract_strided_slice %94 {offsets = [0, 32], sizes = [2, 32], strides = [1, 1]} : vector<2x128xf32> to vector<2x32xf32>
    %97 = vector.extract_strided_slice %94 {offsets = [0, 96], sizes = [2, 32], strides = [1, 1]} : vector<2x128xf32> to vector<2x32xf32>
    %98 = vector.extract_strided_slice %89 {offsets = [0, 64], sizes = [2, 32], strides = [1, 1]} : vector<2x128xf32> to vector<2x32xf32>
    %99 = math.tanh %98 : vector<2x32xf32>
    %100 = arith.mulf %96, %83 : vector<2x32xf32>
    %101 = arith.mulf %95, %99 : vector<2x32xf32>
    %102 = arith.addf %100, %101 : vector<2x32xf32>
    %103 = math.tanh %102 : vector<2x32xf32>
    %104 = arith.mulf %97, %103 : vector<2x32xf32>
    %105 = vector.extract_strided_slice %6 {offsets = [10, 0], sizes = [2, 128], strides = [1, 1]} : vector<16x128xf32> to vector<2x128xf32>
    %106 = arith.truncf %104 : vector<2x32xf32> to vector<2x32xbf16>
    %cst_19 = arith.constant dense<0.000000e+00> : vector<2x128xf32>
    %107 = tpu.matmul %106, %7, %cst_19 {dimension_numbers = #tpu.dot_dimension_numbers<[1], [0], [0], [1], [0, 0, 1, 1], [], []>} : vector<2x32xbf16>, vector<32x128xbf16>, vector<2x128xf32> -> vector<2x128xf32>
    %108 = arith.addf %105, %107 : vector<2x128xf32>
    %109 = arith.negf %108 : vector<2x128xf32>
    %110 = math.exp %109 : vector<2x128xf32>
    %cst_20 = arith.constant 1.000000e+00 : f32
    %111 = vector.broadcast %cst_20 : f32 to vector<2x128xf32>
    %112 = arith.addf %111, %110 : vector<2x128xf32>
    %113 = arith.divf %111, %112 : vector<2x128xf32>
    %114 = vector.extract_strided_slice %113 {offsets = [0, 0], sizes = [2, 32], strides = [1, 1]} : vector<2x128xf32> to vector<2x32xf32>
    %115 = vector.extract_strided_slice %113 {offsets = [0, 32], sizes = [2, 32], strides = [1, 1]} : vector<2x128xf32> to vector<2x32xf32>
    %116 = vector.extract_strided_slice %113 {offsets = [0, 96], sizes = [2, 32], strides = [1, 1]} : vector<2x128xf32> to vector<2x32xf32>
    %117 = vector.extract_strided_slice %108 {offsets = [0, 64], sizes = [2, 32], strides = [1, 1]} : vector<2x128xf32> to vector<2x32xf32>
    %118 = math.tanh %117 : vector<2x32xf32>
    %119 = arith.mulf %115, %102 : vector<2x32xf32>
    %120 = arith.mulf %114, %118 : vector<2x32xf32>
    %121 = arith.addf %119, %120 : vector<2x32xf32>
    %122 = math.tanh %121 : vector<2x32xf32>
    %123 = arith.mulf %116, %122 : vector<2x32xf32>
    %124 = vector.extract_strided_slice %6 {offsets = [12, 0], sizes = [2, 128], strides = [1, 1]} : vector<16x128xf32> to vector<2x128xf32>
    %125 = arith.truncf %123 : vector<2x32xf32> to vector<2x32xbf16>
    %cst_21 = arith.constant dense<0.000000e+00> : vector<2x128xf32>
    %126 = tpu.matmul %125, %7, %cst_21 {dimension_numbers = #tpu.dot_dimension_numbers<[1], [0], [0], [1], [0, 0, 1, 1], [], []>} : vector<2x32xbf16>, vector<32x128xbf16>, vector<2x128xf32> -> vector<2x128xf32>
    %127 = arith.addf %124, %126 : vector<2x128xf32>
    %128 = arith.negf %127 : vector<2x128xf32>
    %129 = math.exp %128 : vector<2x128xf32>
    %cst_22 = arith.constant 1.000000e+00 : f32
    %130 = vector.broadcast %cst_22 : f32 to vector<2x128xf32>
    %131 = arith.addf %130, %129 : vector<2x128xf32>
    %132 = arith.divf %130, %131 : vector<2x128xf32>
    %133 = vector.extract_strided_slice %132 {offsets = [0, 0], sizes = [2, 32], strides = [1, 1]} : vector<2x128xf32> to vector<2x32xf32>
    %134 = vector.extract_strided_slice %132 {offsets = [0, 32], sizes = [2, 32], strides = [1, 1]} : vector<2x128xf32> to vector<2x32xf32>
    %135 = vector.extract_strided_slice %132 {offsets = [0, 96], sizes = [2, 32], strides = [1, 1]} : vector<2x128xf32> to vector<2x32xf32>
    %136 = vector.extract_strided_slice %127 {offsets = [0, 64], sizes = [2, 32], strides = [1, 1]} : vector<2x128xf32> to vector<2x32xf32>
    %137 = math.tanh %136 : vector<2x32xf32>
    %138 = arith.mulf %134, %121 : vector<2x32xf32>
    %139 = arith.mulf %133, %137 : vector<2x32xf32>
    %140 = arith.addf %138, %139 : vector<2x32xf32>
    %141 = math.tanh %140 : vector<2x32xf32>
    %142 = arith.mulf %135, %141 : vector<2x32xf32>
    %143 = vector.extract_strided_slice %6 {offsets = [14, 0], sizes = [2, 128], strides = [1, 1]} : vector<16x128xf32> to vector<2x128xf32>
    %144 = arith.truncf %142 : vector<2x32xf32> to vector<2x32xbf16>
    %cst_23 = arith.constant dense<0.000000e+00> : vector<2x128xf32>
    %145 = tpu.matmul %144, %7, %cst_23 {dimension_numbers = #tpu.dot_dimension_numbers<[1], [0], [0], [1], [0, 0, 1, 1], [], []>} : vector<2x32xbf16>, vector<32x128xbf16>, vector<2x128xf32> -> vector<2x128xf32>
    %146 = arith.addf %143, %145 : vector<2x128xf32>
    %147 = arith.negf %146 : vector<2x128xf32>
    %148 = math.exp %147 : vector<2x128xf32>
    %cst_24 = arith.constant 1.000000e+00 : f32
    %149 = vector.broadcast %cst_24 : f32 to vector<2x128xf32>
    %150 = arith.addf %149, %148 : vector<2x128xf32>
    %151 = arith.divf %149, %150 : vector<2x128xf32>
    %152 = vector.extract_strided_slice %151 {offsets = [0, 0], sizes = [2, 32], strides = [1, 1]} : vector<2x128xf32> to vector<2x32xf32>
    %153 = vector.extract_strided_slice %151 {offsets = [0, 32], sizes = [2, 32], strides = [1, 1]} : vector<2x128xf32> to vector<2x32xf32>
    %154 = vector.extract_strided_slice %151 {offsets = [0, 96], sizes = [2, 32], strides = [1, 1]} : vector<2x128xf32> to vector<2x32xf32>
    %155 = vector.extract_strided_slice %146 {offsets = [0, 64], sizes = [2, 32], strides = [1, 1]} : vector<2x128xf32> to vector<2x32xf32>
    %156 = math.tanh %155 : vector<2x32xf32>
    %157 = arith.mulf %153, %140 : vector<2x32xf32>
    %158 = arith.mulf %152, %156 : vector<2x32xf32>
    %159 = arith.addf %157, %158 : vector<2x32xf32>
    %160 = math.tanh %159 : vector<2x32xf32>
    %161 = arith.mulf %154, %160 : vector<2x32xf32>
    %162 = tpu.concatenate %28, %47, %66, %85, %104, %123, %142, %161 in 0 : vector<2x32xf32>, vector<2x32xf32>, vector<2x32xf32>, vector<2x32xf32>, vector<2x32xf32>, vector<2x32xf32>, vector<2x32xf32>, vector<2x32xf32> -> vector<16x32xf32>
    %163 = arith.truncf %162 : vector<16x32xf32> to vector<16x32xbf16>
    %c0_25 = arith.constant 0 : index
    %c0_26 = arith.constant 0 : index
    %164 = vector.load %arg5[%c0_25, %c0_26] : memref<32x64xbf16, #tpu.memory_space<vmem>>, vector<32x64xbf16>
    %cst_27 = arith.constant dense<0.000000e+00> : vector<16x64xf32>
    %165 = tpu.matmul %163, %164, %cst_27 {dimension_numbers = #tpu.dot_dimension_numbers<[1], [0], [0], [1], [0, 0, 1, 1], [], []>} : vector<16x32xbf16>, vector<32x64xbf16>, vector<16x64xf32> -> vector<16x64xf32>
    %c0_28 = arith.constant 0 : index
    %c0_29 = arith.constant 0 : index
    %166 = vector.load %arg6[%c0_28, %c0_29] : memref<1x64xf32, #tpu.memory_space<vmem>>, vector<1x64xf32>
    %167 = vector.broadcast %166 : vector<1x64xf32> to vector<16x64xf32>
    %168 = arith.addf %165, %167 : vector<16x64xf32>
    %cst_30 = arith.constant 0.000000e+00 : f32
    %169 = vector.broadcast %cst_30 : f32 to vector<16x64xf32>
    %170 = arith.maximumf %168, %169 : vector<16x64xf32>
    %171 = arith.truncf %170 : vector<16x64xf32> to vector<16x64xbf16>
    %c0_31 = arith.constant 0 : index
    %c0_32 = arith.constant 0 : index
    %172 = vector.load %arg7[%c0_31, %c0_32] : memref<64x32xbf16, #tpu.memory_space<vmem>>, vector<64x32xbf16>
    %cst_33 = arith.constant dense<0.000000e+00> : vector<16x32xf32>
    %173 = tpu.matmul %171, %172, %cst_33 {dimension_numbers = #tpu.dot_dimension_numbers<[1], [0], [0], [1], [0, 0, 1, 1], [], []>} : vector<16x64xbf16>, vector<64x32xbf16>, vector<16x32xf32> -> vector<16x32xf32>
    %c0_34 = arith.constant 0 : index
    %c0_35 = arith.constant 0 : index
    %174 = vector.load %arg8[%c0_34, %c0_35] : memref<1x32xf32, #tpu.memory_space<vmem>>, vector<1x32xf32>
    %175 = vector.broadcast %174 : vector<1x32xf32> to vector<16x32xf32>
    %176 = arith.addf %173, %175 : vector<16x32xf32>
    %cst_36 = arith.constant 0.000000e+00 : f32
    %177 = vector.broadcast %cst_36 : f32 to vector<16x32xf32>
    %178 = arith.maximumf %176, %177 : vector<16x32xf32>
    %179 = arith.truncf %178 : vector<16x32xf32> to vector<16x32xbf16>
    %c0_37 = arith.constant 0 : index
    %c0_38 = arith.constant 0 : index
    %180 = vector.load %arg9[%c0_37, %c0_38] : memref<32x8xbf16, #tpu.memory_space<vmem>>, vector<32x8xbf16>
    %cst_39 = arith.constant dense<0.000000e+00> : vector<16x8xf32>
    %181 = tpu.matmul %179, %180, %cst_39 {dimension_numbers = #tpu.dot_dimension_numbers<[1], [0], [0], [1], [0, 0, 1, 1], [], []>} : vector<16x32xbf16>, vector<32x8xbf16>, vector<16x8xf32> -> vector<16x8xf32>
    %c0_40 = arith.constant 0 : index
    %c0_41 = arith.constant 0 : index
    %182 = vector.load %arg10[%c0_40, %c0_41] : memref<1x8xf32, #tpu.memory_space<vmem>>, vector<1x8xf32>
    %183 = vector.broadcast %182 : vector<1x8xf32> to vector<16x8xf32>
    %184 = arith.addf %181, %183 : vector<16x8xf32>
    %c0_42 = arith.constant 0 : index
    %c0_43 = arith.constant 0 : index
    %185 = vector.load %arg11[%c0_42, %c0_43] : memref<16x8xf32, #tpu.memory_space<vmem>>, vector<16x8xf32>
    tpu.vector_store %arg11[%c0_42, %c0_43], %184 {strides = array<i32>} : memref<16x8xf32, #tpu.memory_space<vmem>>, vector<16x8xf32>,
    return
  }
  func.func @transform_0(%arg0: i32) -> (i32, i32) {
    %c0_i32 = arith.constant 0 : i32
    %c0_i32_0 = arith.constant 0 : i32
    %c0_i32_1 = arith.constant 0 : i32
    return %c0_i32, %c0_i32_0 : i32, i32
  }
  func.func @transform_1(%arg0: i32) -> (i32, i32) {
    %c0_i32 = arith.constant 0 : i32
    %c0_i32_0 = arith.constant 0 : i32
    %c0_i32_1 = arith.constant 0 : i32
    return %c0_i32, %c0_i32_0 : i32, i32
  }
  func.func @transform_2(%arg0: i32) -> (i32, i32) {
    %c0_i32 = arith.constant 0 : i32
    %c0_i32_0 = arith.constant 0 : i32
    %c0_i32_1 = arith.constant 0 : i32
    return %c0_i32, %c0_i32_0 : i32, i32
  }
  func.func @transform_3(%arg0: i32) -> (i32, i32) {
    %c0_i32 = arith.constant 0 : i32
    %c0_i32_0 = arith.constant 0 : i32
    %c0_i32_1 = arith.constant 0 : i32
    return %c0_i32, %c0_i32_0 : i32, i32
  }
  func.func @transform_4(%arg0: i32) -> (i32, i32) {
    %c0_i32 = arith.constant 0 : i32
    %c0_i32_0 = arith.constant 0 : i32
    %c0_i32_1 = arith.constant 0 : i32
    return %c0_i32, %c0_i32_0 : i32, i32
  }
  func.func @transform_5(%arg0: i32) -> (i32, i32) {
    %c0_i32 = arith.constant 0 : i32
    %c0_i32_0 = arith.constant 0 : i32
    %c0_i32_1 = arith.constant 0 : i32
    return %c0_i32, %c0_i32_0 : i32, i32
  }
  func.func @transform_6(%arg0: i32) -> (i32, i32) {
    %c0_i32 = arith.constant 0 : i32
    %c0_i32_0 = arith.constant 0 : i32
    %c0_i32_1 = arith.constant 0 : i32
    return %c0_i32, %c0_i32_0 : i32, i32
  }
  func.func @transform_7(%arg0: i32) -> (i32, i32) {
    %c0_i32 = arith.constant 0 : i32
    %c0_i32_0 = arith.constant 0 : i32
    %c0_i32_1 = arith.constant 0 : i32
    return %c0_i32, %c0_i32_0 : i32, i32
  }
  func.func @transform_8(%arg0: i32) -> (i32, i32) {
    %c0_i32 = arith.constant 0 : i32
    %c0_i32_0 = arith.constant 0 : i32
    %c0_i32_1 = arith.constant 0 : i32
    return %c0_i32, %c0_i32_0 : i32, i32
  }
  func.func @transform_9(%arg0: i32) -> (i32, i32) {
    %c0_i32 = arith.constant 0 : i32
    %c0_i32_0 = arith.constant 0 : i32
    %c0_i32_1 = arith.constant 0 : i32
    return %c0_i32, %c0_i32_0 : i32, i32
  }
  func.func @transform_10(%arg0: i32) -> (i32, i32) {
    %c0_i32 = arith.constant 0 : i32
    %c0_i32_0 = arith.constant 0 : i32
    %c0_i32_1 = arith.constant 0 : i32
    return %c0_i32, %c0_i32_0 : i32, i32
  }
}

</mosaic_0001>

<llo_original>
// kernel: lstm_model_forward.1
$region0: #{lstm_model_forward.1}
  #allocation0 [shape = 'u32[]', space=smem, size = 0x4, offset = 0x4, fixed_abs, tag = 'smem constant byte address 0x4 - core index']
  #allocation1 [shape = 'u32[72,128]{1,0:T(1,128)}', space=vmem, size = 0x9000, scoped, tag = 'internal scratch']
  %s0 = inlined_call_operand.vmem [shape: f32[16,16], index: 0, kind: input, shape index: {}]
  %s1 = inlined_call_operand.vmem [shape: bf16[16,128], index: 1, kind: input, shape index: {}]
  %s2 = inlined_call_operand.vmem [shape: bf16[32,128], index: 2, kind: input, shape index: {}]
  %s3 = inlined_call_operand.vmem [shape: f32[1,128], index: 3, kind: input, shape index: {}]
  %s4 = inlined_call_operand.vmem [shape: bf16[32,64], index: 4, kind: input, shape index: {}]
  %s5 = inlined_call_operand.vmem [shape: f32[1,64], index: 5, kind: input, shape index: {}]
  %s6 = inlined_call_operand.vmem [shape: bf16[64,32], index: 6, kind: input, shape index: {}]
  %s7 = inlined_call_operand.vmem [shape: f32[1,32], index: 7, kind: input, shape index: {}]
  %s8 = inlined_call_operand.vmem [shape: bf16[32,8], index: 8, kind: input, shape index: {}]
  %s9 = inlined_call_operand.vmem [shape: f32[1,8], index: 9, kind: input, shape index: {}]
  %s10 = inlined_call_operand.vmem [shape: f32[16,8], index: 10, kind: output, shape index: {}]
  %s11 = sld [smem:[#allocation0]]
  $region50: #{lstm_model_forward.1} parent=0
    _
  %s13 = ssub.s32 1, %s11
  %s14 = scalar_select 0, %s13, %s11
  // Predicated region
  $region2: #{lstm_model_forward.1} parent=0 // pred_check
    _
  $region3: #{lstm_model_forward.1} parent=0 // pred_check_branch
    %16 = sbr.rel (0) target = $region5
  $region4: #{lstm_model_forward.1} parent=0 // pred_region
    _
  $region5: #{lstm_model_forward.1} parent=0 // pred_fallthru
    _
  // Predicated region
  $region6: #{lstm_model_forward.1} parent=0 // pred_check
    _
  $region7: #{lstm_model_forward.1} parent=0 // pred_check_branch
    %18 = sbr.rel (0) target = $region9
  $region8: #{lstm_model_forward.1} parent=0 // pred_region
    _
  $region9: #{lstm_model_forward.1} parent=0 // pred_fallthru
    _
  // Predicated region
  $region10: #{lstm_model_forward.1} parent=0 // pred_check
    _
  $region11: #{lstm_model_forward.1} parent=0 // pred_check_branch
    %20 = sbr.rel (0) target = $region13
  $region12: #{lstm_model_forward.1} parent=0 // pred_region
    _
  $region13: #{lstm_model_forward.1} parent=0 // pred_fallthru
    _
  // Predicated region
  $region14: #{lstm_model_forward.1} parent=0 // pred_check
    _
  $region15: #{lstm_model_forward.1} parent=0 // pred_check_branch
    %22 = sbr.rel (0) target = $region17
  $region16: #{lstm_model_forward.1} parent=0 // pred_region
    _
  $region17: #{lstm_model_forward.1} parent=0 // pred_fallthru
    _
  // Predicated region
  $region18: #{lstm_model_forward.1} parent=0 // pred_check
    _
  $region19: #{lstm_model_forward.1} parent=0 // pred_check_branch
    %24 = sbr.rel (0) target = $region21
  $region20: #{lstm_model_forward.1} parent=0 // pred_region
    _
  $region21: #{lstm_model_forward.1} parent=0 // pred_fallthru
    _
  // Predicated region
  $region22: #{lstm_model_forward.1} parent=0 // pred_check
    _
  $region23: #{lstm_model_forward.1} parent=0 // pred_check_branch
    %26 = sbr.rel (0) target = $region25
  $region24: #{lstm_model_forward.1} parent=0 // pred_region
    _
  $region25: #{lstm_model_forward.1} parent=0 // pred_fallthru
    _
  // Predicated region
  $region26: #{lstm_model_forward.1} parent=0 // pred_check
    _
  $region27: #{lstm_model_forward.1} parent=0 // pred_check_branch
    %28 = sbr.rel (0) target = $region29
  $region28: #{lstm_model_forward.1} parent=0 // pred_region
    _
  $region29: #{lstm_model_forward.1} parent=0 // pred_fallthru
    _
  // Predicated region
  $region30: #{lstm_model_forward.1} parent=0 // pred_check
    _
  $region31: #{lstm_model_forward.1} parent=0 // pred_check_branch
    %30 = sbr.rel (0) target = $region33
  $region32: #{lstm_model_forward.1} parent=0 // pred_region
    _
  $region33: #{lstm_model_forward.1} parent=0 // pred_fallthru
    _
  // Predicated region
  $region34: #{lstm_model_forward.1} parent=0 // pred_check
    _
  $region35: #{lstm_model_forward.1} parent=0 // pred_check_branch
    %32 = sbr.rel (0) target = $region37
  $region36: #{lstm_model_forward.1} parent=0 // pred_region
    _
  $region37: #{lstm_model_forward.1} parent=0 // pred_fallthru
    _
  // Predicated region
  $region38: #{lstm_model_forward.1} parent=0 // pred_check
    _
  $region39: #{lstm_model_forward.1} parent=0 // pred_check_branch
    %34 = sbr.rel (0) target = $region41
  $region40: #{lstm_model_forward.1} parent=0 // pred_region
    _
  $region41: #{lstm_model_forward.1} parent=0 // pred_fallthru
    _
  %v36 = vld [vmem:[%s0] sm:$0xff]
  %v37 = vld [vmem:[%s0 + $0x8] sm:$0xff]
  %v38 = vpack.c.bf16 %v37, %v36
  %v39 = vld [vmem:[%s1] sm:$0xf]
  %v40 = vld [vmem:[%s1 + $0x4] sm:$0xf]
  %v41 = vld [vmem:[%s3] sm:$0x1]
  %v43 = vperm.slane %v41, 0
  %v47 = vunpack.c.l.b16 %v39
  %v48 = vunpack.c.l.b16 %v40
  %v49 = vpack.c.b16 %v48, %v47
  %vm51 = vcmask 130048
  %v53 = vsel %vm51, %v38, 0
  %55 = vmatpush.bf16.msra.mxu0 0
  %56 = vmatpush.bf16.msra.mxu0 0
  %57 = vmatpush.bf16.msra.mxu0 0
  %58 = vmatpush.bf16.msra.mxu0 0
  %59 = vmatpush.bf16.msra.mxu0 0
  %60 = vmatpush.bf16.msra.mxu0 0
  %61 = vmatpush.bf16.msra.mxu0 0
  %62 = vmatpush.bf16.msra.mxu0 %v49
  %63 = vmatmul.bf16.gmra.mxu0 %v53
  %v64 = vpop.f32.mrf.mxu0
  %v65 = vadd.f32 %v43, %v64
  %v66 = vpop.f32.mrf.mxu0
  %v67 = vadd.f32 %v43, %v66
  %68 = vdwg.mxu0
  %v69 = vld [vmem:[%s2] sm:$0xf]
  %v70 = vld [vmem:[%s2 + $0x4] sm:$0xf]
  %v71 = vld [vmem:[%s2 + $0x8] sm:$0xf]
  %v72 = vld [vmem:[%s2 + $0xc] sm:$0xf]
  %v77 = vunpack.c.l.b16 %v69
  %v78 = vunpack.c.l.b16 %v70
  %v79 = vunpack.c.l.b16 %v71
  %v80 = vunpack.c.l.b16 %v72
  %v81 = vpack.c.b16 %v78, %v77
  %v82 = vpack.c.b16 %v80, %v79
  %vm85 = vcmask 261120
  %v87 = vsel %vm85, 0, 0
  %89 = vmatpush.bf16.msra.mxu0 0
  %90 = vmatpush.bf16.msra.mxu0 0
  %91 = vmatpush.bf16.msra.mxu0 0
  %92 = vmatpush.bf16.msra.mxu0 0
  %93 = vmatpush.bf16.msra.mxu0 0
  %94 = vmatpush.bf16.msra.mxu0 0
  %95 = vmatpush.bf16.msra.mxu0 %v82
  %96 = vmatpush.bf16.msra.mxu0 %v81
  %97 = vmatmul.bf16.gmra.mxu0 %v87
  %v98 = vpop.f32.mrf.mxu0
  %v99 = vadd.f32 0.0, %v98
  %v100 = vpop.f32.mrf.mxu0
  %101 = vdwg.mxu0
  %v102 = vadd.f32 %v65, %v99
  %v103 = vxor.u32 %v102, 2147483648
  %v104 = vmul.f32 %v103, 1.442695
  %v105 = vpow.pop %v104
  %v106 = vadd.f32 %v105, 1.0
  %v107 = vrcp.pop %v106
  %v108 = vmul.f32 %v106, %v107
  %v109 = vsub.f32 1.0, %v108
  %v110 = vmul.f32 %v107, %v109
  %v111 = vadd.f32 %v107, %v110
  %vm112 = vweird.f32 %v106
  %vm113 = vweird.f32 %v107
  %vm114 = vmor %vm112, %vm113
  %v115 = vsel %vm114, %v107, %v111
  %v116 = vand.u32 2147483647, %v106
  %vm117 = vcmp.eq.f32.partialorder %v116, 8.507059e+37
  %v118 = vand.u32 %v106, 2147483648
  %v119 = vor.u32 1.1754944e-38, %v118
  %v120 = vsel %vm117, %v119, %v115
  %v121 = vmul.f32 1.0, %v120
  %v122 = vtanh.pop %v102
  %v123 = vmul.f32 %v121, 0.0
  %125 = vrot.lane.b32.xlu0 %v122, 64
  %v126 = vpop.permute.xlu0 %125
  %v128 = vmul.f32 %v121, %v126
  %130 = vrot.lane.b32.xlu0 %v128, 32
  %v131 = vpop.permute.xlu0 %130
  %v133 = vadd.f32 %v123, %v131
  %v134 = vtanh.pop %v133
  %136 = vrot.lane.b32.xlu0 %v134, 64
  %v137 = vpop.permute.xlu0 %136
  %v139 = vmul.f32 %v121, %v137
  %v140 = vpack.c.bf16 %v139, %v139
  %142 = vrot.lane.b32.xlu0 %v140, 32
  %v143 = vpop.permute.xlu0 %142
  %v145 = vsel %vm85, %v143, 0
  %147 = vmatpush.bf16.msra.mxu0 0
  %148 = vmatpush.bf16.msra.mxu0 0
  %149 = vmatpush.bf16.msra.mxu0 0
  %150 = vmatpush.bf16.msra.mxu0 0
  %151 = vmatpush.bf16.msra.mxu0 0
  %152 = vmatpush.bf16.msra.mxu0 0
  %153 = vmatpush.bf16.msra.mxu0 %v82
  %154 = vmatpush.bf16.msra.mxu0 %v81
  %155 = vmatmul.bf16.gmra.mxu0 %v145
  %v156 = vpop.f32.mrf.mxu0
  %v157 = vadd.f32 0.0, %v156
  %v158 = vpop.f32.mrf.mxu0
  %159 = vdwg.mxu0
  %v161 = vrot.slane %v157, 6
  %v163 = vadd.f32 %v65, %v161
  %v164 = vxor.u32 %v163, 2147483648
  %v165 = vmul.f32 %v164, 1.442695
  %v166 = vpow.pop %v165
  %v167 = vadd.f32 %v166, 1.0
  %v168 = vrcp.pop %v167
  %v169 = vmul.f32 %v167, %v168
  %v170 = vsub.f32 1.0, %v169
  %v171 = vmul.f32 %v168, %v170
  %v172 = vadd.f32 %v168, %v171
  %vm173 = vweird.f32 %v167
  %vm174 = vweird.f32 %v168
  %vm175 = vmor %vm173, %vm174
  %v176 = vsel %vm175, %v168, %v172
  %v177 = vand.u32 2147483647, %v167
  %vm178 = vcmp.eq.f32.partialorder %v177, 8.507059e+37
  %v179 = vand.u32 %v167, 2147483648
  %v180 = vor.u32 1.1754944e-38, %v179
  %v181 = vsel %vm178, %v180, %v176
  %v182 = vmul.f32 1.0, %v181
  %v183 = vtanh.pop %v163
  %v185 = vrot.slane %v133, 6
  %v187 = vmul.f32 %v182, %v185
  %189 = vrot.lane.b32.xlu0 %v183, 64
  %v190 = vpop.permute.xlu0 %189
  %v192 = vmul.f32 %v182, %v190
  %194 = vrot.lane.b32.xlu0 %v192, 32
  %v195 = vpop.permute.xlu0 %194
  %v197 = vadd.f32 %v187, %v195
  %v198 = vtanh.pop %v197
  %200 = vrot.lane.b32.xlu0 %v198, 64
  %v201 = vpop.permute.xlu0 %200
  %v203 = vmul.f32 %v182, %v201
  %v204 = vpack.c.bf16 %v203, %v203
  %v206 = vrot.slane %v204, 1
  %207 = vrot.lane.b32.xlu0 %v206, 32
  %v208 = vpop.permute.xlu0 %207
  %v210 = vsel %vm85, %v208, 0
  %212 = vmatpush.bf16.msra.mxu0 0
  %213 = vmatpush.bf16.msra.mxu0 0
  %214 = vmatpush.bf16.msra.mxu0 0
  %215 = vmatpush.bf16.msra.mxu0 0
  %216 = vmatpush.bf16.msra.mxu0 0
  %217 = vmatpush.bf16.msra.mxu0 0
  %218 = vmatpush.bf16.msra.mxu0 %v82
  %219 = vmatpush.bf16.msra.mxu0 %v81
  %220 = vmatmul.bf16.gmra.mxu0 %v210
  %v221 = vpop.f32.mrf.mxu0
  %v222 = vadd.f32 0.0, %v221
  %v223 = vpop.f32.mrf.mxu0
  %224 = vdwg.mxu0
  %v226 = vrot.slane %v222, 4
  %v228 = vadd.f32 %v65, %v226
  %v229 = vxor.u32 %v228, 2147483648
  %v230 = vmul.f32 %v229, 1.442695
  %v231 = vpow.pop %v230
  %v232 = vadd.f32 %v231, 1.0
  %v233 = vrcp.pop %v232
  %v234 = vmul.f32 %v232, %v233
  %v235 = vsub.f32 1.0, %v234
  %v236 = vmul.f32 %v233, %v235
  %v237 = vadd.f32 %v233, %v236
  %vm238 = vweird.f32 %v232
  %vm239 = vweird.f32 %v233
  %vm240 = vmor %vm238, %vm239
  %v241 = vsel %vm240, %v233, %v237
  %v242 = vand.u32 2147483647, %v232
  %vm243 = vcmp.eq.f32.partialorder %v242, 8.507059e+37
  %v244 = vand.u32 %v232, 2147483648
  %v245 = vor.u32 1.1754944e-38, %v244
  %v246 = vsel %vm243, %v245, %v241
  %v247 = vmul.f32 1.0, %v246
  %v248 = vtanh.pop %v228
  %v250 = vrot.slane %v197, 6
  %v252 = vmul.f32 %v247, %v250
  %254 = vrot.lane.b32.xlu0 %v248, 64
  %v255 = vpop.permute.xlu0 %254
  %v257 = vmul.f32 %v247, %v255
  %259 = vrot.lane.b32.xlu0 %v257, 32
  %v260 = vpop.permute.xlu0 %259
  %v262 = vadd.f32 %v252, %v260
  %v263 = vtanh.pop %v262
  %265 = vrot.lane.b32.xlu0 %v263, 64
  %v266 = vpop.permute.xlu0 %265
  %v268 = vmul.f32 %v247, %v266
  %v269 = vpack.c.bf16 %v268, %v268
  %v271 = vrot.slane %v269, 2
  %272 = vrot.lane.b32.xlu0 %v271, 32
  %v273 = vpop.permute.xlu0 %272
  %v275 = vsel %vm85, %v273, 0
  %277 = vmatpush.bf16.msra.mxu0 0
  %278 = vmatpush.bf16.msra.mxu0 0
  %279 = vmatpush.bf16.msra.mxu0 0
  %280 = vmatpush.bf16.msra.mxu0 0
  %281 = vmatpush.bf16.msra.mxu0 0
  %282 = vmatpush.bf16.msra.mxu0 0
  %283 = vmatpush.bf16.msra.mxu0 %v82
  %284 = vmatpush.bf16.msra.mxu0 %v81
  %285 = vmatmul.bf16.gmra.mxu0 %v275
  %v286 = vpop.f32.mrf.mxu0
  %v287 = vadd.f32 0.0, %v286
  %v288 = vpop.f32.mrf.mxu0
  %289 = vdwg.mxu0
  %v291 = vrot.slane %v287, 2
  %v293 = vadd.f32 %v65, %v291
  %v294 = vxor.u32 %v293, 2147483648
  %v295 = vmul.f32 %v294, 1.442695
  %v296 = vpow.pop %v295
  %v297 = vadd.f32 %v296, 1.0
  %v298 = vrcp.pop %v297
  %v299 = vmul.f32 %v297, %v298
  %v300 = vsub.f32 1.0, %v299
  %v301 = vmul.f32 %v298, %v300
  %v302 = vadd.f32 %v298, %v301
  %vm303 = vweird.f32 %v297
  %vm304 = vweird.f32 %v298
  %vm305 = vmor %vm303, %vm304
  %v306 = vsel %vm305, %v298, %v302
  %v307 = vand.u32 2147483647, %v297
  %vm308 = vcmp.eq.f32.partialorder %v307, 8.507059e+37
  %v309 = vand.u32 %v297, 2147483648
  %v310 = vor.u32 1.1754944e-38, %v309
  %v311 = vsel %vm308, %v310, %v306
  %v312 = vmul.f32 1.0, %v311
  %v313 = vtanh.pop %v293
  %v315 = vrot.slane %v262, 6
  %v317 = vmul.f32 %v312, %v315
  %319 = vrot.lane.b32.xlu0 %v313, 64
  %v320 = vpop.permute.xlu0 %319
  %v322 = vmul.f32 %v312, %v320
  %324 = vrot.lane.b32.xlu0 %v322, 32
  %v325 = vpop.permute.xlu0 %324
  %v327 = vadd.f32 %v317, %v325
  %v328 = vtanh.pop %v327
  %330 = vrot.lane.b32.xlu0 %v328, 64
  %v331 = vpop.permute.xlu0 %330
  %v333 = vmul.f32 %v312, %v331
  %v334 = vpack.c.bf16 %v333, %v333
  %v336 = vrot.slane %v334, 3
  %337 = vrot.lane.b32.xlu0 %v336, 32
  %v338 = vpop.permute.xlu0 %337
  %v340 = vsel %vm85, %v338, 0
  %342 = vmatpush.bf16.msra.mxu0 0
  %343 = vmatpush.bf16.msra.mxu0 0
  %344 = vmatpush.bf16.msra.mxu0 0
  %345 = vmatpush.bf16.msra.mxu0 0
  %346 = vmatpush.bf16.msra.mxu0 0
  %347 = vmatpush.bf16.msra.mxu0 0
  %348 = vmatpush.bf16.msra.mxu0 %v82
  %349 = vmatpush.bf16.msra.mxu0 %v81
  %350 = vmatmul.bf16.gmra.mxu0 %v340
  %v351 = vpop.f32.mrf.mxu0
  %v352 = vadd.f32 0.0, %v351
  %v353 = vpop.f32.mrf.mxu0
  %354 = vdwg.mxu0
  %v355 = vadd.f32 %v67, %v352
  %v356 = vxor.u32 %v355, 2147483648
  %v357 = vmul.f32 %v356, 1.442695
  %v358 = vpow.pop %v357
  %v359 = vadd.f32 %v358, 1.0
  %v360 = vrcp.pop %v359
  %v361 = vmul.f32 %v359, %v360
  %v362 = vsub.f32 1.0, %v361
  %v363 = vmul.f32 %v360, %v362
  %v364 = vadd.f32 %v360, %v363
  %vm365 = vweird.f32 %v359
  %vm366 = vweird.f32 %v360
  %vm367 = vmor %vm365, %vm366
  %v368 = vsel %vm367, %v360, %v364
  %v369 = vand.u32 2147483647, %v359
  %vm370 = vcmp.eq.f32.partialorder %v369, 8.507059e+37
  %v371 = vand.u32 %v359, 2147483648
  %v372 = vor.u32 1.1754944e-38, %v371
  %v373 = vsel %vm370, %v372, %v368
  %v374 = vmul.f32 1.0, %v373
  %v375 = vtanh.pop %v355
  %v377 = vrot.slane %v327, 6
  %v379 = vmul.f32 %v374, %v377
  %381 = vrot.lane.b32.xlu0 %v375, 64
  %v382 = vpop.permute.xlu0 %381
  %v384 = vmul.f32 %v374, %v382
  %386 = vrot.lane.b32.xlu0 %v384, 32
  %v387 = vpop.permute.xlu0 %386
  %v389 = vadd.f32 %v379, %v387
  %v390 = vtanh.pop %v389
  %392 = vrot.lane.b32.xlu0 %v390, 64
  %v393 = vpop.permute.xlu0 %392
  %v395 = vmul.f32 %v374, %v393
  %v396 = vpack.c.bf16 %v395, %v395
  %398 = vrot.lane.b32.xlu0 %v396, 32
  %v399 = vpop.permute.xlu0 %398
  %v401 = vsel %vm85, %v399, 0
  %403 = vmatpush.bf16.msra.mxu0 0
  %404 = vmatpush.bf16.msra.mxu0 0
  %405 = vmatpush.bf16.msra.mxu0 0
  %406 = vmatpush.bf16.msra.mxu0 0
  %407 = vmatpush.bf16.msra.mxu0 0
  %408 = vmatpush.bf16.msra.mxu0 0
  %409 = vmatpush.bf16.msra.mxu0 %v82
  %410 = vmatpush.bf16.msra.mxu0 %v81
  %411 = vmatmul.bf16.gmra.mxu0 %v401
  %v412 = vpop.f32.mrf.mxu0
  %v413 = vadd.f32 0.0, %v412
  %v414 = vpop.f32.mrf.mxu0
  %415 = vdwg.mxu0
  %v417 = vrot.slane %v413, 6
  %v419 = vadd.f32 %v67, %v417
  %v420 = vxor.u32 %v419, 2147483648
  %v421 = vmul.f32 %v420, 1.442695
  %v422 = vpow.pop %v421
  %v423 = vadd.f32 %v422, 1.0
  %v424 = vrcp.pop %v423
  %v425 = vmul.f32 %v423, %v424
  %v426 = vsub.f32 1.0, %v425
  %v427 = vmul.f32 %v424, %v426
  %v428 = vadd.f32 %v424, %v427
  %vm429 = vweird.f32 %v423
  %vm430 = vweird.f32 %v424
  %vm431 = vmor %vm429, %vm430
  %v432 = vsel %vm431, %v424, %v428
  %v433 = vand.u32 2147483647, %v423
  %vm434 = vcmp.eq.f32.partialorder %v433, 8.507059e+37
  %v435 = vand.u32 %v423, 2147483648
  %v436 = vor.u32 1.1754944e-38, %v435
  %v437 = vsel %vm434, %v436, %v432
  %v438 = vmul.f32 1.0, %v437
  %v439 = vtanh.pop %v419
  %v441 = vrot.slane %v389, 6
  %v443 = vmul.f32 %v438, %v441
  %445 = vrot.lane.b32.xlu0 %v439, 64
  %v446 = vpop.permute.xlu0 %445
  %v448 = vmul.f32 %v438, %v446
  %450 = vrot.lane.b32.xlu0 %v448, 32
  %v451 = vpop.permute.xlu0 %450
  %v453 = vadd.f32 %v443, %v451
  %v454 = vtanh.pop %v453
  %456 = vrot.lane.b32.xlu0 %v454, 64
  %v457 = vpop.permute.xlu0 %456
  %v459 = vmul.f32 %v438, %v457
  %v460 = vpack.c.bf16 %v459, %v459
  %v462 = vrot.slane %v460, 1
  %463 = vrot.lane.b32.xlu0 %v462, 32
  %v464 = vpop.permute.xlu0 %463
  %v466 = vsel %vm85, %v464, 0
  %468 = vmatpush.bf16.msra.mxu0 0
  %469 = vmatpush.bf16.msra.mxu0 0
  %470 = vmatpush.bf16.msra.mxu0 0
  %471 = vmatpush.bf16.msra.mxu0 0
  %472 = vmatpush.bf16.msra.mxu0 0
  %473 = vmatpush.bf16.msra.mxu0 0
  %474 = vmatpush.bf16.msra.mxu0 %v82
  %475 = vmatpush.bf16.msra.mxu0 %v81
  %476 = vmatmul.bf16.gmra.mxu0 %v466
  %v477 = vpop.f32.mrf.mxu0
  %v478 = vadd.f32 0.0, %v477
  %v479 = vpop.f32.mrf.mxu0
  %480 = vdwg.mxu0
  %v482 = vrot.slane %v478, 4
  %v484 = vadd.f32 %v67, %v482
  %v485 = vxor.u32 %v484, 2147483648
  %v486 = vmul.f32 %v485, 1.442695
  %v487 = vpow.pop %v486
  %v488 = vadd.f32 %v487, 1.0
  %v489 = vrcp.pop %v488
  %v490 = vmul.f32 %v488, %v489
  %v491 = vsub.f32 1.0, %v490
  %v492 = vmul.f32 %v489, %v491
  %v493 = vadd.f32 %v489, %v492
  %vm494 = vweird.f32 %v488
  %vm495 = vweird.f32 %v489
  %vm496 = vmor %vm494, %vm495
  %v497 = vsel %vm496, %v489, %v493
  %v498 = vand.u32 2147483647, %v488
  %vm499 = vcmp.eq.f32.partialorder %v498, 8.507059e+37
  %v500 = vand.u32 %v488, 2147483648
  %v501 = vor.u32 1.1754944e-38, %v500
  %v502 = vsel %vm499, %v501, %v497
  %v503 = vmul.f32 1.0, %v502
  %v504 = vtanh.pop %v484
  %v506 = vrot.slane %v453, 6
  %v508 = vmul.f32 %v503, %v506
  %510 = vrot.lane.b32.xlu0 %v504, 64
  %v511 = vpop.permute.xlu0 %510
  %v513 = vmul.f32 %v503, %v511
  %515 = vrot.lane.b32.xlu0 %v513, 32
  %v516 = vpop.permute.xlu0 %515
  %v518 = vadd.f32 %v508, %v516
  %v519 = vtanh.pop %v518
  %521 = vrot.lane.b32.xlu0 %v519, 64
  %v522 = vpop.permute.xlu0 %521
  %v524 = vmul.f32 %v503, %v522
  %v525 = vpack.c.bf16 %v524, %v524
  %v527 = vrot.slane %v525, 2
  %528 = vrot.lane.b32.xlu0 %v527, 32
  %v529 = vpop.permute.xlu0 %528
  %v531 = vsel %vm85, %v529, 0
  %533 = vmatpush.bf16.msra.mxu0 0
  %534 = vmatpush.bf16.msra.mxu0 0
  %535 = vmatpush.bf16.msra.mxu0 0
  %536 = vmatpush.bf16.msra.mxu0 0
  %537 = vmatpush.bf16.msra.mxu0 0
  %538 = vmatpush.bf16.msra.mxu0 0
  %539 = vmatpush.bf16.msra.mxu0 %v82
  %540 = vmatpush.bf16.msra.mxu0 %v81
  %541 = vmatmul.bf16.gmra.mxu0 %v531
  %v542 = vpop.f32.mrf.mxu0
  %v543 = vadd.f32 0.0, %v542
  %v544 = vpop.f32.mrf.mxu0
  %545 = vdwg.mxu0
  %v547 = vrot.slane %v543, 2
  %v549 = vadd.f32 %v67, %v547
  %v550 = vxor.u32 %v549, 2147483648
  %v551 = vmul.f32 %v550, 1.442695
  %v552 = vpow.pop %v551
  %v553 = vadd.f32 %v552, 1.0
  %v554 = vrcp.pop %v553
  %v555 = vmul.f32 %v553, %v554
  %v556 = vsub.f32 1.0, %v555
  %v557 = vmul.f32 %v554, %v556
  %v558 = vadd.f32 %v554, %v557
  %vm559 = vweird.f32 %v553
  %vm560 = vweird.f32 %v554
  %vm561 = vmor %vm559, %vm560
  %v562 = vsel %vm561, %v554, %v558
  %v563 = vand.u32 2147483647, %v553
  %vm564 = vcmp.eq.f32.partialorder %v563, 8.507059e+37
  %v565 = vand.u32 %v553, 2147483648
  %v566 = vor.u32 1.1754944e-38, %v565
  %v567 = vsel %vm564, %v566, %v562
  %v568 = vmul.f32 1.0, %v567
  %v569 = vtanh.pop %v549
  %v571 = vrot.slane %v518, 6
  %v573 = vmul.f32 %v568, %v571
  %575 = vrot.lane.b32.xlu0 %v569, 64
  %v576 = vpop.permute.xlu0 %575
  %v578 = vmul.f32 %v568, %v576
  %580 = vrot.lane.b32.xlu0 %v578, 32
  %v581 = vpop.permute.xlu0 %580
  %v583 = vadd.f32 %v573, %v581
  %v584 = vtanh.pop %v583
  %586 = vrot.lane.b32.xlu0 %v584, 64
  %v587 = vpop.permute.xlu0 %586
  %v589 = vmul.f32 %v568, %v587
  %vm590 = vcmask 1041408
  %v591 = vsel %vm590, %v139, %v203
  %vm592 = vcmask 1043456
  %v593 = vsel %vm592, %v591, %v268
  %vm594 = vcmask 1045504
  %v595 = vsel %vm594, %v593, %v333
  %v596 = vsel %vm590, %v395, %v459
  %v597 = vsel %vm592, %v596, %v524
  %v598 = vsel %vm594, %v597, %v589
  %v599 = vpack.c.bf16 %v598, %v595
  %v600 = vld [vmem:[%s4] sm:$0xf]
  %v601 = vld [vmem:[%s4 + $0x4] sm:$0xf]
  %v602 = vld [vmem:[%s4 + $0x8] sm:$0xf]
  %v603 = vld [vmem:[%s4 + $0xc] sm:$0xf]
  %v604 = vld [vmem:[%s5] sm:$0x1]
  %v606 = vperm.slane %v604, 0
  %609 = vrot.lane.b32.xlu0 %v599, 32
  %v610 = vpop.permute.xlu0 %609
  %v615 = vunpack.c.l.b16 %v600
  %v616 = vunpack.c.l.b16 %v601
  %v617 = vunpack.c.l.b16 %v602
  %v618 = vunpack.c.l.b16 %v603
  %v619 = vpack.c.b16 %v616, %v615
  %v620 = vpack.c.b16 %v618, %v617
  %v624 = vsel %vm85, %v610, 0
  %626 = vmatpush.bf16.msra.mxu0 0
  %627 = vmatpush.bf16.msra.mxu0 0
  %628 = vmatpush.bf16.msra.mxu0 0
  %629 = vmatpush.bf16.msra.mxu0 0
  %630 = vmatpush.bf16.msra.mxu0 0
  %631 = vmatpush.bf16.msra.mxu0 0
  %632 = vmatpush.bf16.msra.mxu0 %v620
  %633 = vmatpush.bf16.msra.mxu0 %v619
  %634 = vmatmul.bf16.gmra.mxu0 %v624
  %v635 = vpop.f32.mrf.mxu0
  %v636 = vadd.f32 %v606, %v635
  %v637 = vpop.f32.mrf.mxu0
  %v638 = vadd.f32 %v606, %v637
  %639 = vdwg.mxu0
  %v640 = vmax.f32 %v636, 0.0
  %v641 = vmax.f32 %v638, 0.0
  %v642 = vpack.c.bf16 %v641, %v640
  %v643 = vld [vmem:[%s6] sm:$0xf]
  %v644 = vld [vmem:[%s6 + $0x4] sm:$0xf]
  %v645 = vld [vmem:[%s6 + $0x8] sm:$0xf]
  %v646 = vld [vmem:[%s6 + $0xc] sm:$0xf]
  %v647 = vld [vmem:[%s6 + $0x10] sm:$0xf]
  %v648 = vld [vmem:[%s6 + $0x14] sm:$0xf]
  %v649 = vld [vmem:[%s6 + $0x18] sm:$0xf]
  %v650 = vld [vmem:[%s6 + $0x1c] sm:$0xf]
  %v651 = vld [vmem:[%s7] sm:$0x1]
  %v653 = vperm.slane %v651, 0
  %v663 = vunpack.c.l.b16 %v643
  %v664 = vunpack.c.l.b16 %v644
  %v665 = vunpack.c.l.b16 %v645
  %v666 = vunpack.c.l.b16 %v646
  %v667 = vunpack.c.l.b16 %v647
  %v668 = vunpack.c.l.b16 %v648
  %v669 = vunpack.c.l.b16 %v649
  %v670 = vunpack.c.l.b16 %v650
  %v671 = vpack.c.b16 %v664, %v663
  %v672 = vpack.c.b16 %v666, %v665
  %v673 = vpack.c.b16 %v668, %v667
  %v674 = vpack.c.b16 %v670, %v669
  %vm679 = vcmask 523264
  %v681 = vsel %vm679, %v642, 0
  %683 = vmatpush.bf16.msra.mxu0 0
  %684 = vmatpush.bf16.msra.mxu0 0
  %685 = vmatpush.bf16.msra.mxu0 0
  %686 = vmatpush.bf16.msra.mxu0 0
  %687 = vmatpush.bf16.msra.mxu0 %v674
  %688 = vmatpush.bf16.msra.mxu0 %v673
  %689 = vmatpush.bf16.msra.mxu0 %v672
  %690 = vmatpush.bf16.msra.mxu0 %v671
  %691 = vmatmul.bf16.gmra.mxu0 %v681
  %v692 = vpop.f32.mrf.mxu0
  %v693 = vadd.f32 %v653, %v692
  %v694 = vpop.f32.mrf.mxu0
  %v695 = vadd.f32 %v653, %v694
  %696 = vdwg.mxu0
  %v697 = vmax.f32 %v693, 0.0
  %v698 = vmax.f32 %v695, 0.0
  %v699 = vpack.c.bf16 %v698, %v697
  %v700 = vld [vmem:[%s8] sm:$0xf]
  %v701 = vld [vmem:[%s8 + $0x4] sm:$0xf]
  %v702 = vld [vmem:[%s8 + $0x8] sm:$0xf]
  %v703 = vld [vmem:[%s8 + $0xc] sm:$0xf]
  %v704 = vld [vmem:[%s9] sm:$0x1]
  %v706 = vperm.slane %v704, 0
  %v712 = vunpack.c.l.b16 %v700
  %v713 = vunpack.c.l.b16 %v701
  %v714 = vunpack.c.l.b16 %v702
  %v715 = vunpack.c.l.b16 %v703
  %v716 = vpack.c.b16 %v713, %v712
  %v717 = vpack.c.b16 %v715, %v714
  %v721 = vsel %vm85, %v699, 0
  %723 = vmatpush.bf16.msra.mxu0 0
  %724 = vmatpush.bf16.msra.mxu0 0
  %725 = vmatpush.bf16.msra.mxu0 0
  %726 = vmatpush.bf16.msra.mxu0 0
  %727 = vmatpush.bf16.msra.mxu0 0
  %728 = vmatpush.bf16.msra.mxu0 0
  %729 = vmatpush.bf16.msra.mxu0 %v717
  %730 = vmatpush.bf16.msra.mxu0 %v716
  %731 = vmatmul.bf16.gmra.mxu0 %v721
  %v732 = vpop.f32.mrf.mxu0
  %v733 = vadd.f32 %v706, %v732
  %v734 = vpop.f32.mrf.mxu0
  %v735 = vadd.f32 %v706, %v734
  %736 = vdwg.mxu0
  %vm737 = vcmask 64512
  %738 = vst.msk [vmem:[%s10] sm:$0xff] %vm737, %v733
  %739 = vst.msk [vmem:[%s10 + $0x8] sm:$0xff] %vm737, %v735
  // Predicated region
  $region42: #{lstm_model_forward.1} parent=0 // pred_check
    _
  $region43: #{lstm_model_forward.1} parent=0 // pred_check_branch
    %741 = sbr.rel (0) target = $region45
  $region44: #{lstm_model_forward.1} parent=0 // pred_region
    _
  $region45: #{lstm_model_forward.1} parent=0 // pred_fallthru
    _
  // Predicated region
  $region46: #{lstm_model_forward.1} parent=0 // pred_check
    _
  $region47: #{lstm_model_forward.1} parent=0 // pred_check_branch
    %743 = sbr.rel (0) target = $region49
  $region48: #{lstm_model_forward.1} parent=0 // pred_region
    _
  $region49: #{lstm_model_forward.1} parent=0 // pred_fallthru
    _

</llo_original>
